<compile_context>
chip_gen: v5e
topology: v5e:2x2
jax: 0.10.0
libtpu: 0.0.40
codegen_flags: <defaults>
</compile_context>

<pallas_src>
import jax
import jax.numpy as jnp
from jax.experimental import pallas as pl
from jax.experimental.pallas import tpu as pltpu

_MIN_TILE = 16      # bf16 sublane packing: 16 rows per vreg
_MAX_TILE = 4096


def _round_up(v, m):
    return ((v + m - 1) // m) * m


def _round_down(v, m):
    return max(m, (v // m) * m)


# -----------------------------------------------------------------------------
# Kernels
# -----------------------------------------------------------------------------
def _ipfs_kernel_packed(x_ref, w1_ref, w2_ref, wf1_ref, wf2_ref, b_ref, out_ref):
    """Small-H path: W2 is one [3H,3H] block-diagonal matrix (single MXU pass)."""
    H = wf2_ref.shape[0]
    cd = w1_ref.dtype

    x = x_ref[...]                                                    # bf16 [TB, H]
    h = jnp.dot(x, w1_ref[...], preferred_element_type=jnp.float32) + b_ref[0:1, :]
    h = jnp.maximum(h, 0.0)                                           # ReLU (f32)
    # t = [t_a | t_b | t_c]  (block-diagonal second layers, one matmul)
    t = jnp.dot(h.astype(cd), w2_ref[...],
                preferred_element_type=jnp.float32) + b_ref[1:2, :]
    # fusion layer 1: cat(t_a,t_b,t_c) @ WF1 == t @ WF1 (concat already packed)
    g = jnp.dot(t.astype(cd), wf1_ref[...],
                preferred_element_type=jnp.float32) + b_ref[2:3, :H]
    g = jnp.maximum(g, 0.0)
    fused = jnp.dot(g.astype(cd), wf2_ref[...],
                    preferred_element_type=jnp.float32) + b_ref[3:4, :H]
    # Lane-dense store [fused | t_a | t_b | t_c]; at H=32 this is exactly one
    # full 128-lane vreg per row -> unmasked stores, one writeback DMA.
    out_ref[...] = jnp.concatenate([fused, t], axis=-1).astype(out_ref.dtype)


def _ipfs_kernel_split(x_ref, w1_ref, w2_ref, wf1_ref, wf2_ref, b_ref, out_ref):
    """Large-H path (H % 128 == 0): W2 / WF1 stacked [3,H,H]; three dense [H,H]
    dots instead of one 2/3-zero block-diagonal matmul; results stored directly
    into 128-lane-aligned slices of out_ref (no concat temp)."""
    H = wf2_ref.shape[0]
    cd = w1_ref.dtype

    x = x_ref[...]                                                    # bf16 [TB, H]
    h = jnp.dot(x, w1_ref[...], preferred_element_type=jnp.float32) + b_ref[0:1, :]
    h = jnp.maximum(h, 0.0).astype(cd)                                # [TB, 3H]

    g = b_ref[2:3, :H]                                                # bf1 (broadcasts)
    for k in range(3):                                                # static unroll
        t_k = (jnp.dot(h[:, k * H:(k + 1) * H], w2_ref[k],
                       preferred_element_type=jnp.float32)
               + b_ref[1:2, k * H:(k + 1) * H])                       # [TB, H]
        out_ref[:, (1 + k) * H:(2 + k) * H] = t_k.astype(out_ref.dtype)
        # fusion layer 1 as a sum of three partial dots: concat never built
        g = g + jnp.dot(t_k.astype(cd), wf1_ref[k],
                        preferred_element_type=jnp.float32)
    g = jnp.maximum(g, 0.0).astype(cd)
    fused = jnp.dot(g, wf2_ref[...],
                    preferred_element_type=jnp.float32) + b_ref[3:4, :H]
    out_ref[:, 0:H] = fused.astype(out_ref.dtype)


# -----------------------------------------------------------------------------
# Host wrapper
# -----------------------------------------------------------------------------
def _vmem_budget_bytes():
    try:
        return int(pltpu.get_tpu_info().vmem_capacity_bytes * 0.75)
    except Exception:
        return 48 << 20   # conservative: 0.75 * 64 MiB (v7x per-TC VMEM)


def _pick_tile(B, H, x_itemsize, out_itemsize, weight_bytes, budget):
    """Largest 16-row-aligned batch tile fitting the VMEM budget with
    double-buffered I/O (worst-case double-buffered weights), capped so the
    batch grid has >= 2 steps (v7x dual-TC sharding) whenever B allows."""
    if B <= _MIN_TILE:
        return B
    per_row = 2 * (H * x_itemsize + 4 * H * out_itemsize)      # 2x = double buffer
    avail = budget - 2 * weight_bytes - (8 << 20)               # compiler scratch slack
    tile = _round_down(min(_MAX_TILE, max(_MIN_TILE, avail // per_row)), _MIN_TILE)
    half = _round_up((B + 1) // 2, _MIN_TILE)                   # >= 2 grid steps
    return max(_MIN_TILE, min(tile, half))


def _build_call(kernel, padded_B, tile_b, H, packed, out_dtype, vmem_limit,
                cost, single_buffer_weights):
    def const_spec(shape):
        kwargs = {}
        if single_buffer_weights:
            # constant index_map -> the block never changes; single-buffer it
            kwargs["pipeline_mode"] = pl.Buffered(1)
        return pl.BlockSpec(shape, lambda i: (0,) * len(shape), **kwargs)

    grid_spec = pltpu.PrefetchScalarGridSpec(
        num_scalar_prefetch=0,
        grid=(padded_B // tile_b,),
        in_specs=[
            pl.BlockSpec((tile_b, H), lambda i: (i, 0)),        # activations
            const_spec(packed["w1"].shape),
            const_spec(packed["w2"].shape),
            const_spec(packed["wf1"].shape),
            const_spec(packed["wf2"].shape),
            const_spec(packed["bias"].shape),
        ],
        out_specs=pl.BlockSpec((tile_b, 4 * H), lambda i: (i, 0)),
    )
    return pl.pallas_call(
        kernel,
        out_shape=jax.ShapeDtypeStruct((padded_B, 4 * H), out_dtype),
        grid_spec=grid_spec,
        compiler_params=pltpu.CompilerParams(
            dimension_semantics=("parallel",),        # 2-TC sharding on v7x
            vmem_limit_bytes=vmem_limit,
        ),
        cost_estimate=cost,
    )


def instruction_prompt_few_shot(embeddings, packed, *, tile_b=None,
                                out_dtype=jnp.bfloat16):
    """Fused Pallas forward.

    Args:
      embeddings: [B, H] float array.
      packed: dict from pack_params().
      out_dtype: dtype of the packed output writeback (bf16 default halves the
        dominant HBM writeback traffic; pass jnp.float32 for f32 outputs).
    Returns:
      (fused_output [B, H], [t_a, t_b, t_c] each [B, H]) in out_dtype.
    """
    B, H = embeddings.shape
    split_w2 = packed["w2"].ndim == 3
    kernel = _ipfs_kernel_split if split_w2 else _ipfs_kernel_packed

    w_dtype = packed["w1"].dtype
    x_itemsize = jnp.dtype(w_dtype).itemsize
    out_itemsize = jnp.dtype(out_dtype).itemsize
    weight_bytes = sum(int(packed[k].size) * packed[k].dtype.itemsize
                       for k in ("w1", "w2", "wf1", "wf2", "bias"))
    budget = _vmem_budget_bytes()

    if tile_b is None:
        tile_b = _pick_tile(B, H, x_itemsize, out_itemsize, weight_bytes, budget)
    tile_b = min(tile_b, B)
    padded_B = _round_up(B, tile_b)

    # Activations cast to the weight dtype host-side (halves activation DMA,
    # removes a per-tile VPU cast). Padded rows produce garbage (bias adds)
    # but are sliced off below.
    x = embeddings.astype(w_dtype)
    if padded_B != B:
        x = jnp.pad(x, ((0, padded_B - B), (0, 0)))

    per_tile_io = 2 * (tile_b * H * x_itemsize + tile_b * 4 * H * out_itemsize)
    vmem_limit = int(min(budget, max(2 * weight_bytes + per_tile_io + (16 << 20),
                                     24 << 20)))

    flops = 2 * padded_B * (10 if split_w2 else 16) * H * H
    bytes_accessed = (padded_B * H * x_itemsize + weight_bytes
                      + padded_B * 4 * H * out_itemsize)
    cost = pl.CostEstimate(flops=int(flops), transcendentals=0,
                           bytes_accessed=int(bytes_accessed))

    args = (x, packed["w1"], packed["w2"], packed["wf1"], packed["wf2"],
            packed["bias"])
    try:
        out = _build_call(kernel, padded_B, tile_b, H, packed, out_dtype,
                          vmem_limit, cost, single_buffer_weights=True)(*args)
    except Exception:
        # TODO(synk): drop this fallback once pl.Buffered(1) single-buffering of
        # constant-index weight blocks is guaranteed; semantics are identical,
        # only weight VMEM residency differs.
        out = _build_call(kernel, padded_B, tile_b, H, packed, out_dtype,
                          vmem_limit, cost, single_buffer_weights=False)(*args)

    fused = out[:B, 0:H]
    t_a = out[:B, H:2 * H]
    t_b = out[:B, 2 * H:3 * H]
    t_c = out[:B, 3 * H:4 * H]
    return fused, [t_a, t_b, t_c]


# -----------------------------------------------------------------------------
# Parameters (PyTorch-style master params in f32) + packing for the kernel
# -----------------------------------------------------------------------------
def init_params(key, hidden_dim):
    """PyTorch-style uniform(+-1/sqrt(fan_in)) init. Weights stored [in, out]."""
    H = hidden_dim

    def linear(k, fan_in, fan_out):
        kw, kb = jax.random.split(k)
        bound = 1.0 / jnp.sqrt(jnp.float32(fan_in))
        w = jax.random.uniform(kw, (fan_in, fan_out), jnp.float32, -bound, bound)
        b = jax.random.uniform(kb, (fan_out,), jnp.float32, -bound, bound)
        return w, b

    keys = jax.random.split(key, 8)
    p = {}
    for name, k1, k2 in (("a", keys[0], keys[1]),
                         ("b", keys[2], keys[3]),
                         ("c", keys[4], keys[5])):
        p[f"w1{name}"], p[f"b1{name}"] = linear(k1, H, H)
        p[f"w2{name}"], p[f"b2{name}"] = linear(k2, H, H)
    p["wf1"], p["bf1"] = linear(keys[6], 3 * H, H)   # Linear(3H -> H)
    p["wf2"], p["bf2"] = linear(keys[7], H, H)       # Linear(H -> H)
    return p


def pack_params(p, hidden_dim, weight_dtype=jnp.bfloat16):
    """Packs per-layer params into the kernel layout.

    H % 128 == 0  -> split layout: w2/wf1 stacked [3,H,H] (dense, no zeros).
    otherwise     -> packed layout: w2 block-diagonal [3H,3H], wf1 [3H,H].
    Pass weight_dtype=jnp.float32 for an f32-weight path (bit-closer to PyTorch).
    """
    H = hidden_dim
    split_w2 = (H % 128 == 0)

    w1 = jnp.concatenate([p["w1a"], p["w1b"], p["w1c"]], axis=1)          # [H, 3H]
    if split_w2:
        w2 = jnp.stack([p["w2a"], p["w2b"], p["w2c"]], axis=0)            # [3, H, H]
        wf1 = p["wf1"].reshape(3, H, H)                                   # [3, H, H]
    else:
        z = jnp.zeros((H, H), jnp.float32)
        w2 = jnp.block([[p["w2a"], z, z],
                        [z, p["w2b"], z],
                        [z, z, p["w2c"]]])                                # [3H, 3H]
        wf1 = p["wf1"]                                                    # [3H, H]

    bias = jnp.zeros((4, 3 * H), jnp.float32)
    bias = bias.at[0].set(jnp.concatenate([p["b1a"], p["b1b"], p["b1c"]]))
    bias = bias.at[1].set(jnp.concatenate([p["b2a"], p["b2b"], p["b2c"]]))
    bias = bias.at[2, :H].set(p["bf1"])
    bias = bias.at[3, :H].set(p["bf2"])

    return {
        "w1": w1.astype(weight_dtype),
        "w2": w2.astype(weight_dtype),
        "wf1": wf1.astype(weight_dtype),
        "wf2": p["wf2"].astype(weight_dtype),
        "bias": bias,                                                     # f32
    }


# -----------------------------------------------------------------------------
# Pure-JAX reference with the original module structure (3 separate encoders,
# explicit concat, fusion MLP), same bf16-matmul / f32-accumulate policy.
# -----------------------------------------------------------------------------
def _reference(embeddings, p, compute_dtype=jnp.bfloat16):
    def linear(x, w, b):
        return jnp.dot(x.astype(compute_dtype), w.astype(compute_dtype),
                       preferred_element_type=jnp.float32) + b.astype(jnp.float32)

    def encoder(x, w1, b1, w2, b2):
        h = jnp.maximum(linear(x, w1, b1), 0.0)
        return linear(h, w2, b2)

    t_a = encoder(embeddings, p["w1a"], p["b1a"], p["w2a"], p["b2a"])
    t_b = encoder(embeddings, p["w1b"], p["b1b"], p["w2b"], p["b2b"])
    t_c = encoder(embeddings, p["w1c"], p["b1c"], p["w2c"], p["b2c"])
    combined = jnp.concatenate([t_a, t_b, t_c], axis=-1)
    h = jnp.maximum(linear(combined, p["wf1"], p["bf1"]), 0.0)
    fused = linear(h, p["wf2"], p["bf2"])
    return fused, [t_a, t_b, t_c]


def _check(fused, templates, ref_fused, ref_templates, tag):
    f = fused.astype(jnp.float32)
    assert jnp.allclose(f, ref_fused, atol=2e-2, rtol=2e-2), \
        (tag, float(jnp.max(jnp.abs(f - ref_fused))))
    for got, want in zip(templates, ref_templates):
        g = got.astype(jnp.float32)
        assert jnp.allclose(g, want, atol=2e-2, rtol=2e-2), \
            (tag, float(jnp.max(jnp.abs(g - want))))


if __name__ == "__main__":
    key = jax.random.PRNGKey(0)
    k_emb, k_par, k_emb2, k_par2 = jax.random.split(key, 4)

    # --- demo shape from the module: embeddings [batch_size, hidden_size] ----
    B, H = 8, 32
    embeddings = jax.random.normal(k_emb, (B, H), jnp.float32)
    params = init_params(k_par, H)
    packed = pack_params(params, H)                       # packed block-diag path

    fused, templates = instruction_prompt_few_shot(embeddings, packed)
    jax.block_until_ready(fused)
    for t in templates:
        jax.block_until_ready(t)
    ref_fused, ref_templates = _reference(embeddings, params)
    _check(fused, templates, ref_fused, ref_templates, "H=32")

    # --- also exercise the split-W2 path (H % 128 == 0), multi-step batch grid
    B2, H2 = 48, 128
    embeddings2 = jax.random.normal(k_emb2, (B2, H2), jnp.float32)
    params2 = init_params(k_par2, H2)
    packed2 = pack_params(params2, H2)                    # stacked [3,H,H] path

    fused2, templates2 = instruction_prompt_few_shot(embeddings2, packed2)
    jax.block_until_ready(fused2)
    for t in templates2:
        jax.block_until_ready(t)
    ref_fused2, ref_templates2 = _reference(embeddings2, params2)
    _check(fused2, templates2, ref_fused2, ref_templates2, "H=128")

    print("KERNEL_OK")
</pallas_src>

<mosaic_0001>
module attributes {stable_mosaic.version = 11 : i64} {
  func.func @_ipfs_kernel_packed(%arg0: i32, %arg1: memref<8x32xbf16, #tpu.memory_space<vmem>>, %arg2: memref<32x96xbf16, #tpu.memory_space<vmem>>, %arg3: memref<96x96xbf16, #tpu.memory_space<vmem>>, %arg4: memref<96x32xbf16, #tpu.memory_space<vmem>>, %arg5: memref<32x32xbf16, #tpu.memory_space<vmem>>, %arg6: memref<4x96xf32, #tpu.memory_space<vmem>>, %arg7: memref<8x128xbf16, #tpu.memory_space<vmem>>) attributes {dimension_semantics = [#tpu.dimension_semantics<parallel>], iteration_bounds = array<i64: 1>, scalar_prefetch = 0 : i64, scratch_operands = 0 : i64, tpu.core_type = #tpu.core_type<tc>, window_params = [{transform_indices = @transform_0, window_bounds = array<i64: 8, 32>}, {pipeline_mode = #tpu.pipeline_mode<synchronous>, transform_indices = @transform_1, window_bounds = array<i64: 32, 96>}, {pipeline_mode = #tpu.pipeline_mode<synchronous>, transform_indices = @transform_2, window_bounds = array<i64: 96, 96>}, {pipeline_mode = #tpu.pipeline_mode<synchronous>, transform_indices = @transform_3, window_bounds = array<i64: 96, 32>}, {pipeline_mode = #tpu.pipeline_mode<synchronous>, transform_indices = @transform_4, window_bounds = array<i64: 32, 32>}, {pipeline_mode = #tpu.pipeline_mode<synchronous>, transform_indices = @transform_5, window_bounds = array<i64: 4, 96>}, {transform_indices = @transform_6, window_bounds = array<i64: 8, 128>}]} {
    %c0 = arith.constant 0 : index
    %c0_0 = arith.constant 0 : index
    %0 = vector.load %arg1[%c0, %c0_0] : memref<8x32xbf16, #tpu.memory_space<vmem>>, vector<8x32xbf16>
    %c0_1 = arith.constant 0 : index
    %c0_2 = arith.constant 0 : index
    %1 = vector.load %arg2[%c0_1, %c0_2] : memref<32x96xbf16, #tpu.memory_space<vmem>>, vector<32x96xbf16>
    %cst = arith.constant dense<0.000000e+00> : vector<8x96xf32>
    %2 = tpu.matmul %0, %1, %cst {dimension_numbers = #tpu.dot_dimension_numbers<[1], [0], [0], [1], [0, 0, 1, 1], [], []>} : vector<8x32xbf16>, vector<32x96xbf16>, vector<8x96xf32> -> vector<8x96xf32>
    %c0_3 = arith.constant 0 : index
    %c0_4 = arith.constant 0 : index
    %3 = vector.load %arg6[%c0_3, %c0_4] : memref<4x96xf32, #tpu.memory_space<vmem>>, vector<1x96xf32>
    %4 = vector.broadcast %3 : vector<1x96xf32> to vector<8x96xf32>
    %5 = arith.addf %2, %4 : vector<8x96xf32>
    %cst_5 = arith.constant 0.000000e+00 : f32
    %6 = vector.broadcast %cst_5 : f32 to vector<8x96xf32>
    %7 = arith.maximumf %5, %6 : vector<8x96xf32>
    %8 = arith.truncf %7 : vector<8x96xf32> to vector<8x96xbf16>
    %c0_6 = arith.constant 0 : index
    %c0_7 = arith.constant 0 : index
    %9 = vector.load %arg3[%c0_6, %c0_7] : memref<96x96xbf16, #tpu.memory_space<vmem>>, vector<96x96xbf16>
    %cst_8 = arith.constant dense<0.000000e+00> : vector<8x96xf32>
    %10 = tpu.matmul %8, %9, %cst_8 {dimension_numbers = #tpu.dot_dimension_numbers<[1], [0], [0], [1], [0, 0, 1, 1], [], []>} : vector<8x96xbf16>, vector<96x96xbf16>, vector<8x96xf32> -> vector<8x96xf32>
    %c1 = arith.constant 1 : index
    %c0_9 = arith.constant 0 : index
    %11 = vector.load %arg6[%c1, %c0_9] : memref<4x96xf32, #tpu.memory_space<vmem>>, vector<1x96xf32>
    %12 = vector.broadcast %11 : vector<1x96xf32> to vector<8x96xf32>
    %13 = arith.addf %10, %12 : vector<8x96xf32>
    %14 = arith.truncf %13 : vector<8x96xf32> to vector<8x96xbf16>
    %c0_10 = arith.constant 0 : index
    %c0_11 = arith.constant 0 : index
    %15 = vector.load %arg4[%c0_10, %c0_11] : memref<96x32xbf16, #tpu.memory_space<vmem>>, vector<96x32xbf16>
    %cst_12 = arith.constant dense<0.000000e+00> : vector<8x32xf32>
    %16 = tpu.matmul %14, %15, %cst_12 {dimension_numbers = #tpu.dot_dimension_numbers<[1], [0], [0], [1], [0, 0, 1, 1], [], []>} : vector<8x96xbf16>, vector<96x32xbf16>, vector<8x32xf32> -> vector<8x32xf32>
    %c2 = arith.constant 2 : index
    %c0_13 = arith.constant 0 : index
    %17 = vector.load %arg6[%c2, %c0_13] : memref<4x96xf32, #tpu.memory_space<vmem>>, vector<1x32xf32>
    %18 = vector.broadcast %17 : vector<1x32xf32> to vector<8x32xf32>
    %19 = arith.addf %16, %18 : vector<8x32xf32>
    %cst_14 = arith.constant 0.000000e+00 : f32
    %20 = vector.broadcast %cst_14 : f32 to vector<8x32xf32>
    %21 = arith.maximumf %19, %20 : vector<8x32xf32>
    %22 = arith.truncf %21 : vector<8x32xf32> to vector<8x32xbf16>
    %c0_15 = arith.constant 0 : index
    %c0_16 = arith.constant 0 : index
    %23 = vector.load %arg5[%c0_15, %c0_16] : memref<32x32xbf16, #tpu.memory_space<vmem>>, vector<32x32xbf16>
    %cst_17 = arith.constant dense<0.000000e+00> : vector<8x32xf32>
    %24 = tpu.matmul %22, %23, %cst_17 {dimension_numbers = #tpu.dot_dimension_numbers<[1], [0], [0], [1], [0, 0, 1, 1], [], []>} : vector<8x32xbf16>, vector<32x32xbf16>, vector<8x32xf32> -> vector<8x32xf32>
    %c3 = arith.constant 3 : index
    %c0_18 = arith.constant 0 : index
    %25 = vector.load %arg6[%c3, %c0_18] : memref<4x96xf32, #tpu.memory_space<vmem>>, vector<1x32xf32>
    %26 = vector.broadcast %25 : vector<1x32xf32> to vector<8x32xf32>
    %27 = arith.addf %24, %26 : vector<8x32xf32>
    %28 = tpu.concatenate %27, %13 in 1 : vector<8x32xf32>, vector<8x96xf32> -> vector<8x128xf32>
    %29 = arith.truncf %28 : vector<8x128xf32> to vector<8x128xbf16>
    %c0_19 = arith.constant 0 : index
    %c0_20 = arith.constant 0 : index
    %30 = vector.load %arg7[%c0_19, %c0_20] : memref<8x128xbf16, #tpu.memory_space<vmem>>, vector<8x128xbf16>
    tpu.vector_store %arg7[%c0_19, %c0_20], %29 {strides = array<i32>} : memref<8x128xbf16, #tpu.memory_space<vmem>>, vector<8x128xbf16>,
    return
  }
  func.func @transform_0(%arg0: i32) -> (i32, i32) {
    %c0_i32 = arith.constant 0 : i32
    %c0_i32_0 = arith.constant 0 : i32
    return %arg0, %c0_i32 : i32, i32
  }
  func.func @transform_1(%arg0: i32) -> (i32, i32) {
    %c0_i32 = arith.constant 0 : i32
    %c0_i32_0 = arith.constant 0 : i32
    %c0_i32_1 = arith.constant 0 : i32
    return %c0_i32, %c0_i32_0 : i32, i32
  }
  func.func @transform_2(%arg0: i32) -> (i32, i32) {
    %c0_i32 = arith.constant 0 : i32
    %c0_i32_0 = arith.constant 0 : i32
    %c0_i32_1 = arith.constant 0 : i32
    return %c0_i32, %c0_i32_0 : i32, i32
  }
  func.func @transform_3(%arg0: i32) -> (i32, i32) {
    %c0_i32 = arith.constant 0 : i32
    %c0_i32_0 = arith.constant 0 : i32
    %c0_i32_1 = arith.constant 0 : i32
    return %c0_i32, %c0_i32_0 : i32, i32
  }
  func.func @transform_4(%arg0: i32) -> (i32, i32) {
    %c0_i32 = arith.constant 0 : i32
    %c0_i32_0 = arith.constant 0 : i32
    %c0_i32_1 = arith.constant 0 : i32
    return %c0_i32, %c0_i32_0 : i32, i32
  }
  func.func @transform_5(%arg0: i32) -> (i32, i32) {
    %c0_i32 = arith.constant 0 : i32
    %c0_i32_0 = arith.constant 0 : i32
    %c0_i32_1 = arith.constant 0 : i32
    return %c0_i32, %c0_i32_0 : i32, i32
  }
  func.func @transform_6(%arg0: i32) -> (i32, i32) {
    %c0_i32 = arith.constant 0 : i32
    %c0_i32_0 = arith.constant 0 : i32
    return %arg0, %c0_i32 : i32, i32
  }
}

module attributes {stable_mosaic.version = 11 : i64} {
  func.func @_ipfs_kernel_packed(%arg0: i32, %arg1: memref<8x32xbf16, #tpu.memory_space<vmem>>, %arg2: memref<32x96xbf16, #tpu.memory_space<vmem>>, %arg3: memref<96x96xbf16, #tpu.memory_space<vmem>>, %arg4: memref<96x32xbf16, #tpu.memory_space<vmem>>, %arg5: memref<32x32xbf16, #tpu.memory_space<vmem>>, %arg6: memref<4x96xf32, #tpu.memory_space<vmem>>, %arg7: memref<8x128xbf16, #tpu.memory_space<vmem>>) attributes {dimension_semantics = [#tpu.dimension_semantics<parallel>], iteration_bounds = array<i64: 1>, scalar_prefetch = 0 : i64, scratch_operands = 0 : i64, tpu.core_type = #tpu.core_type<tc>, window_params = [{transform_indices = @transform_0, window_bounds = array<i64: 8, 32>}, {pipeline_mode = #tpu.pipeline_mode<synchronous>, transform_indices = @transform_1, window_bounds = array<i64: 32, 96>}, {pipeline_mode = #tpu.pipeline_mode<synchronous>, transform_indices = @transform_2, window_bounds = array<i64: 96, 96>}, {pipeline_mode = #tpu.pipeline_mode<synchronous>, transform_indices = @transform_3, window_bounds = array<i64: 96, 32>}, {pipeline_mode = #tpu.pipeline_mode<synchronous>, transform_indices = @transform_4, window_bounds = array<i64: 32, 32>}, {pipeline_mode = #tpu.pipeline_mode<synchronous>, transform_indices = @transform_5, window_bounds = array<i64: 4, 96>}, {transform_indices = @transform_6, window_bounds = array<i64: 8, 128>}]} {
    %c0 = arith.constant 0 : index
    %c0_0 = arith.constant 0 : index
    %0 = vector.load %arg1[%c0, %c0_0] : memref<8x32xbf16, #tpu.memory_space<vmem>>, vector<8x32xbf16>
    %c0_1 = arith.constant 0 : index
    %c0_2 = arith.constant 0 : index
    %1 = vector.load %arg2[%c0_1, %c0_2] : memref<32x96xbf16, #tpu.memory_space<vmem>>, vector<32x96xbf16>
    %cst = arith.constant dense<0.000000e+00> : vector<8x96xf32>
    %2 = tpu.matmul %0, %1, %cst {dimension_numbers = #tpu.dot_dimension_numbers<[1], [0], [0], [1], [0, 0, 1, 1], [], []>} : vector<8x32xbf16>, vector<32x96xbf16>, vector<8x96xf32> -> vector<8x96xf32>
    %c0_3 = arith.constant 0 : index
    %c0_4 = arith.constant 0 : index
    %3 = vector.load %arg6[%c0_3, %c0_4] : memref<4x96xf32, #tpu.memory_space<vmem>>, vector<1x96xf32>
    %4 = vector.broadcast %3 : vector<1x96xf32> to vector<8x96xf32>
    %5 = arith.addf %2, %4 : vector<8x96xf32>
    %cst_5 = arith.constant 0.000000e+00 : f32
    %6 = vector.broadcast %cst_5 : f32 to vector<8x96xf32>
    %7 = arith.maximumf %5, %6 : vector<8x96xf32>
    %8 = arith.truncf %7 : vector<8x96xf32> to vector<8x96xbf16>
    %c0_6 = arith.constant 0 : index
    %c0_7 = arith.constant 0 : index
    %9 = vector.load %arg3[%c0_6, %c0_7] : memref<96x96xbf16, #tpu.memory_space<vmem>>, vector<96x96xbf16>
    %cst_8 = arith.constant dense<0.000000e+00> : vector<8x96xf32>
    %10 = tpu.matmul %8, %9, %cst_8 {dimension_numbers = #tpu.dot_dimension_numbers<[1], [0], [0], [1], [0, 0, 1, 1], [], []>} : vector<8x96xbf16>, vector<96x96xbf16>, vector<8x96xf32> -> vector<8x96xf32>
    %c1 = arith.constant 1 : index
    %c0_9 = arith.constant 0 : index
    %11 = vector.load %arg6[%c1, %c0_9] : memref<4x96xf32, #tpu.memory_space<vmem>>, vector<1x96xf32>
    %12 = vector.broadcast %11 : vector<1x96xf32> to vector<8x96xf32>
    %13 = arith.addf %10, %12 : vector<8x96xf32>
    %14 = arith.truncf %13 : vector<8x96xf32> to vector<8x96xbf16>
    %c0_10 = arith.constant 0 : index
    %c0_11 = arith.constant 0 : index
    %15 = vector.load %arg4[%c0_10, %c0_11] : memref<96x32xbf16, #tpu.memory_space<vmem>>, vector<96x32xbf16>
    %cst_12 = arith.constant dense<0.000000e+00> : vector<8x32xf32>
    %16 = tpu.matmul %14, %15, %cst_12 {dimension_numbers = #tpu.dot_dimension_numbers<[1], [0], [0], [1], [0, 0, 1, 1], [], []>} : vector<8x96xbf16>, vector<96x32xbf16>, vector<8x32xf32> -> vector<8x32xf32>
    %c2 = arith.constant 2 : index
    %c0_13 = arith.constant 0 : index
    %17 = vector.load %arg6[%c2, %c0_13] : memref<4x96xf32, #tpu.memory_space<vmem>>, vector<1x32xf32>
    %18 = vector.broadcast %17 : vector<1x32xf32> to vector<8x32xf32>
    %19 = arith.addf %16, %18 : vector<8x32xf32>
    %cst_14 = arith.constant 0.000000e+00 : f32
    %20 = vector.broadcast %cst_14 : f32 to vector<8x32xf32>
    %21 = arith.maximumf %19, %20 : vector<8x32xf32>
    %22 = arith.truncf %21 : vector<8x32xf32> to vector<8x32xbf16>
    %c0_15 = arith.constant 0 : index
    %c0_16 = arith.constant 0 : index
    %23 = vector.load %arg5[%c0_15, %c0_16] : memref<32x32xbf16, #tpu.memory_space<vmem>>, vector<32x32xbf16>
    %cst_17 = arith.constant dense<0.000000e+00> : vector<8x32xf32>
    %24 = tpu.matmul %22, %23, %cst_17 {dimension_numbers = #tpu.dot_dimension_numbers<[1], [0], [0], [1], [0, 0, 1, 1], [], []>} : vector<8x32xbf16>, vector<32x32xbf16>, vector<8x32xf32> -> vector<8x32xf32>
    %c3 = arith.constant 3 : index
    %c0_18 = arith.constant 0 : index
    %25 = vector.load %arg6[%c3, %c0_18] : memref<4x96xf32, #tpu.memory_space<vmem>>, vector<1x32xf32>
    %26 = vector.broadcast %25 : vector<1x32xf32> to vector<8x32xf32>
    %27 = arith.addf %24, %26 : vector<8x32xf32>
    %28 = tpu.concatenate %27, %13 in 1 : vector<8x32xf32>, vector<8x96xf32> -> vector<8x128xf32>
    %29 = arith.truncf %28 : vector<8x128xf32> to vector<8x128xbf16>
    %c0_19 = arith.constant 0 : index
    %c0_20 = arith.constant 0 : index
    %30 = vector.load %arg7[%c0_19, %c0_20] : memref<8x128xbf16, #tpu.memory_space<vmem>>, vector<8x128xbf16>
    tpu.vector_store %arg7[%c0_19, %c0_20], %29 {strides = array<i32>} : memref<8x128xbf16, #tpu.memory_space<vmem>>, vector<8x128xbf16>,
    return
  }
  func.func @transform_0(%arg0: i32) -> (i32, i32) {
    %c0_i32 = arith.constant 0 : i32
    %c0_i32_0 = arith.constant 0 : i32
    return %arg0, %c0_i32 : i32, i32
  }
  func.func @transform_1(%arg0: i32) -> (i32, i32) {
    %c0_i32 = arith.constant 0 : i32
    %c0_i32_0 = arith.constant 0 : i32
    %c0_i32_1 = arith.constant 0 : i32
    return %c0_i32, %c0_i32_0 : i32, i32
  }
  func.func @transform_2(%arg0: i32) -> (i32, i32) {
    %c0_i32 = arith.constant 0 : i32
    %c0_i32_0 = arith.constant 0 : i32
    %c0_i32_1 = arith.constant 0 : i32
    return %c0_i32, %c0_i32_0 : i32, i32
  }
  func.func @transform_3(%arg0: i32) -> (i32, i32) {
    %c0_i32 = arith.constant 0 : i32
    %c0_i32_0 = arith.constant 0 : i32
    %c0_i32_1 = arith.constant 0 : i32
    return %c0_i32, %c0_i32_0 : i32, i32
  }
  func.func @transform_4(%arg0: i32) -> (i32, i32) {
    %c0_i32 = arith.constant 0 : i32
    %c0_i32_0 = arith.constant 0 : i32
    %c0_i32_1 = arith.constant 0 : i32
    return %c0_i32, %c0_i32_0 : i32, i32
  }
  func.func @transform_5(%arg0: i32) -> (i32, i32) {
    %c0_i32 = arith.constant 0 : i32
    %c0_i32_0 = arith.constant 0 : i32
    %c0_i32_1 = arith.constant 0 : i32
    return %c0_i32, %c0_i32_0 : i32, i32
  }
  func.func @transform_6(%arg0: i32) -> (i32, i32) {
    %c0_i32 = arith.constant 0 : i32
    %c0_i32_0 = arith.constant 0 : i32
    return %arg0, %c0_i32 : i32, i32
  }
}

</mosaic_0001>

<llo_original>
// kernel: tpu_custom_call.1
$region0: #{tpu_custom_call.1}
  #allocation0 [shape = 'u32[]', space=smem, size = 0x4, offset = 0x4, fixed_abs, tag = 'smem constant byte address 0x4 - core index']
  #allocation1 [shape = 'u32[72,128]{1,0:T(1,128)}', space=vmem, size = 0x9000, scoped, tag = 'internal scratch']
  %s0 = inlined_call_operand.hbm [shape: bf16[8,32], index: 0, kind: input, shape index: {}]
  %s1 = inlined_call_operand.vmem [shape: bf16[32,96], index: 1, kind: input, shape index: {}]
  %s2 = inlined_call_operand.vmem [shape: bf16[96,96], index: 2, kind: input, shape index: {}]
  %s3 = inlined_call_operand.vmem [shape: bf16[96,32], index: 3, kind: input, shape index: {}]
  %s4 = inlined_call_operand.hbm [shape: bf16[32,32], index: 4, kind: input, shape index: {}]
  %s5 = inlined_call_operand.vmem [shape: f32[4,96], index: 5, kind: input, shape index: {}]
  %s6 = inlined_call_operand.hbm [shape: bf16[8,128], index: 6, kind: output, shape index: {}]
  %s7 = sld [smem:[#allocation0]]
  $region42: #{tpu_custom_call.1} parent=0
    _
  %s9 = ssub.s32 1, %s7
  %s10 = scalar_select 0, %s9, %s7
  $region1: #{tpu_custom_call.1} parent=0
    #allocation2 [shape = 'u8[2048]{0}', space=vmem, size = 0x800, scoped, tag = 'input window, operand 0, single buffered']
    #allocation3 [shape = 's32[1]{0}', space=sflag, size = 0x4, scoped, tag = 'scoped memory for tpu_custom_call.1']
    #allocation4 [shape = 's32[1]{0}', space=sflag, size = 0x4, scoped, tag = 'scoped memory for tpu_custom_call.1']
    #allocation5 [shape = 'u8[8192]{0}', space=vmem, size = 0x2000, scoped, tag = 'input window, operand 4, single buffered']
    #allocation6 [shape = 's32[1]{0}', space=sflag, size = 0x4, scoped, tag = 'scoped memory for tpu_custom_call.1']
    #allocation7 [shape = 'u8[2048]{0}', space=vmem, size = 0x800, scoped, tag = 'output window, operand 0, single buffered']
    %11 = vsyncpa [#allocation3], 0
    %12 = vsyncpa [#allocation6], 0
    %13 = vsyncpa [#allocation4], 0
    // Predicated region
    $region2: #{tpu_custom_call.1} parent=1 // pred_check
      _
    $region3: #{tpu_custom_call.1} parent=1 // pred_check_branch
      %15 = sbr.rel (0) target = $region5
    $region4: #{tpu_custom_call.1} parent=1 // pred_region
      %17 = vsyncadd [#allocation3], 0
      %s19 = sshll.u32 %s0, 4
      %s20 = int_to_ptr.hbm [resolvable:$true] %s19
      %s21 = sshll.u32 [#allocation2], 4
      %s22 = int_to_ptr.vmem [resolvable:$true] %s21
      %24 = dma.hbm_to_vmem [thread:$0]  %s20, 64, %s22, [#allocation3]
    $region5: #{tpu_custom_call.1} parent=1 // pred_fallthru
      _
    // Predicated region
    $region6: #{tpu_custom_call.1} parent=1 // pred_check
      _
    $region7: #{tpu_custom_call.1} parent=1 // pred_check_branch
      %26 = sbr.rel (0) target = $region9
    $region8: #{tpu_custom_call.1} parent=1 // pred_region
      _
    $region9: #{tpu_custom_call.1} parent=1 // pred_fallthru
      _
    // Predicated region
    $region10: #{tpu_custom_call.1} parent=1 // pred_check
      _
    $region11: #{tpu_custom_call.1} parent=1 // pred_check_branch
      %28 = sbr.rel (0) target = $region13
    $region12: #{tpu_custom_call.1} parent=1 // pred_region
      _
    $region13: #{tpu_custom_call.1} parent=1 // pred_fallthru
      _
    // Predicated region
    $region14: #{tpu_custom_call.1} parent=1 // pred_check
      _
    $region15: #{tpu_custom_call.1} parent=1 // pred_check_branch
      %30 = sbr.rel (0) target = $region17
    $region16: #{tpu_custom_call.1} parent=1 // pred_region
      _
    $region17: #{tpu_custom_call.1} parent=1 // pred_fallthru
      _
    // Predicated region
    $region18: #{tpu_custom_call.1} parent=1 // pred_check
      _
    $region19: #{tpu_custom_call.1} parent=1 // pred_check_branch
      %32 = sbr.rel (0) target = $region21
    $region20: #{tpu_custom_call.1} parent=1 // pred_region
      %34 = vsyncadd [#allocation6], 0
      %s35 = sshll.u32 %s4, 4
      %s36 = int_to_ptr.hbm [resolvable:$true] %s35
      %s37 = sshll.u32 [#allocation5], 4
      %s38 = int_to_ptr.vmem [resolvable:$true] %s37
      %43 = dma.hbm_to_vmem [thread:$0]  %s36, 256, %s38, [#allocation6], 64, 64, 4
    $region21: #{tpu_custom_call.1} parent=1 // pred_fallthru
      _
    // Predicated region
    $region22: #{tpu_custom_call.1} parent=1 // pred_check
      _
    $region23: #{tpu_custom_call.1} parent=1 // pred_check_branch
      %45 = sbr.rel (0) target = $region25
    $region24: #{tpu_custom_call.1} parent=1 // pred_region
      _
    $region25: #{tpu_custom_call.1} parent=1 // pred_fallthru
      _
    // Predicated region
    $region26: #{tpu_custom_call.1} parent=1 // pred_check
      _
    $region27: #{tpu_custom_call.1} parent=1 // pred_check_branch
      %47 = sbr.rel (0) target = $region29
    $region28: #{tpu_custom_call.1} parent=1 // pred_region
      %49 = dma.done [#allocation3], 64
    $region29: #{tpu_custom_call.1} parent=1 // pred_fallthru
      _
    // Predicated region
    $region30: #{tpu_custom_call.1} parent=1 // pred_check
      _
    $region31: #{tpu_custom_call.1} parent=1 // pred_check_branch
      %51 = sbr.rel (0) target = $region33
    $region32: #{tpu_custom_call.1} parent=1 // pred_region
      %53 = dma.done [#allocation6], 256
    $region33: #{tpu_custom_call.1} parent=1 // pred_fallthru
      _
    %v55 = vld [vmem:[#allocation2] sm:$0xf]
    %v56 = vld [vmem:[%s1] sm:$0xf]
    %v57 = vld [vmem:[%s1 + $0x4] sm:$0xf]
    %v58 = vld [vmem:[%s1 + $0x8] sm:$0xf]
    %v59 = vld [vmem:[%s1 + $0xc] sm:$0xf]
    %v60 = vld [vmem:[%s5] sm:$0x1]
    %v61 = vperm.slane %v60, 0
    %v66 = vunpack.c.l.b16 %v56
    %v67 = vunpack.c.l.b16 %v57
    %v68 = vunpack.c.l.b16 %v58
    %v69 = vunpack.c.l.b16 %v59
    %v70 = vpack.c.b16 %v67, %v66
    %v71 = vpack.c.b16 %v69, %v68
    %vm74 = vcmask 261120
    %v76 = vsel %vm74, %v55, 0
    %78 = vmatpush.bf16.msra.mxu0 0
    %79 = vmatpush.bf16.msra.mxu0 0
    %80 = vmatpush.bf16.msra.mxu0 0
    %81 = vmatpush.bf16.msra.mxu0 0
    %82 = vmatpush.bf16.msra.mxu0 0
    %83 = vmatpush.bf16.msra.mxu0 0
    %84 = vmatpush.bf16.msra.mxu0 %v71
    %85 = vmatpush.bf16.msra.mxu0 %v70
    %86 = vmatmul.bf16.gmra.mxu0 %v76
    %v87 = vpop.f32.mrf.mxu0
    %v88 = vadd.f32 %v61, %v87
    %v89 = vpop.f32.mrf.mxu0
    %90 = vdwg.mxu0
    %v91 = vmax.f32 %v88, 0.0
    %v92 = vpack.c.bf16 %v91, %v91
    %v93 = vld [vmem:[%s2] sm:$0xf]
    %v94 = vld [vmem:[%s2 + $0x4] sm:$0xf]
    %v95 = vld [vmem:[%s2 + $0x8] sm:$0xf]
    %v96 = vld [vmem:[%s2 + $0xc] sm:$0xf]
    %v97 = vld [vmem:[%s2 + $0x10] sm:$0xf]
    %v98 = vld [vmem:[%s2 + $0x14] sm:$0xf]
    %v99 = vld [vmem:[%s2 + $0x18] sm:$0xf]
    %v100 = vld [vmem:[%s2 + $0x1c] sm:$0xf]
    %v101 = vld [vmem:[%s2 + $0x20] sm:$0xf]
    %v102 = vld [vmem:[%s2 + $0x24] sm:$0xf]
    %v103 = vld [vmem:[%s2 + $0x28] sm:$0xf]
    %v104 = vld [vmem:[%s2 + $0x2c] sm:$0xf]
    %v105 = vld [vmem:[%s5 + $0x1] sm:$0x1]
    %v106 = vperm.slane %v105, 0
    %v119 = vunpack.c.l.b16 %v93
    %v120 = vunpack.c.l.b16 %v94
    %v121 = vunpack.c.l.b16 %v95
    %v122 = vunpack.c.l.b16 %v96
    %v123 = vunpack.c.l.b16 %v97
    %v124 = vunpack.c.l.b16 %v98
    %v125 = vunpack.c.l.b16 %v99
    %v126 = vunpack.c.l.b16 %v100
    %v127 = vunpack.c.l.b16 %v101
    %v128 = vunpack.c.l.b16 %v102
    %v129 = vunpack.c.l.b16 %v103
    %v130 = vunpack.c.l.b16 %v104
    %v131 = vpack.c.b16 %v120, %v119
    %v132 = vpack.c.b16 %v122, %v121
    %v133 = vpack.c.b16 %v124, %v123
    %v134 = vpack.c.b16 %v126, %v125
    %v135 = vpack.c.b16 %v128, %v127
    %v136 = vpack.c.b16 %v130, %v129
    %vm143 = vcmask 785408
    %v145 = vsel %vm143, %v92, 0
    %147 = vmatpush.bf16.msra.mxu0 0
    %148 = vmatpush.bf16.msra.mxu0 0
    %149 = vmatpush.bf16.msra.mxu0 %v136
    %150 = vmatpush.bf16.msra.mxu0 %v135
    %151 = vmatpush.bf16.msra.mxu0 %v134
    %152 = vmatpush.bf16.msra.mxu0 %v133
    %153 = vmatpush.bf16.msra.mxu0 %v132
    %154 = vmatpush.bf16.msra.mxu0 %v131
    %155 = vmatmul.bf16.gmra.mxu0 %v145
    %v156 = vpop.f32.mrf.mxu0
    %v157 = vadd.f32 %v106, %v156
    %v158 = vpop.f32.mrf.mxu0
    %159 = vdwg.mxu0
    %v160 = vpack.c.bf16 %v157, %v157
    %v161 = vld [vmem:[%s3] sm:$0xf]
    %v162 = vld [vmem:[%s3 + $0x4] sm:$0xf]
    %v163 = vld [vmem:[%s3 + $0x8] sm:$0xf]
    %v164 = vld [vmem:[%s3 + $0xc] sm:$0xf]
    %v165 = vld [vmem:[%s3 + $0x10] sm:$0xf]
    %v166 = vld [vmem:[%s3 + $0x14] sm:$0xf]
    %v167 = vld [vmem:[%s3 + $0x18] sm:$0xf]
    %v168 = vld [vmem:[%s3 + $0x1c] sm:$0xf]
    %v169 = vld [vmem:[%s3 + $0x20] sm:$0xf]
    %v170 = vld [vmem:[%s3 + $0x24] sm:$0xf]
    %v171 = vld [vmem:[%s3 + $0x28] sm:$0xf]
    %v172 = vld [vmem:[%s3 + $0x2c] sm:$0xf]
    %v173 = vld [vmem:[%s5 + $0x2] sm:$0x1]
    %v174 = vperm.slane %v173, 0
    %v187 = vunpack.c.l.b16 %v161
    %v188 = vunpack.c.l.b16 %v162
    %v189 = vunpack.c.l.b16 %v163
    %v190 = vunpack.c.l.b16 %v164
    %v191 = vunpack.c.l.b16 %v165
    %v192 = vunpack.c.l.b16 %v166
    %v193 = vunpack.c.l.b16 %v167
    %v194 = vunpack.c.l.b16 %v168
    %v195 = vunpack.c.l.b16 %v169
    %v196 = vunpack.c.l.b16 %v170
    %v197 = vunpack.c.l.b16 %v171
    %v198 = vunpack.c.l.b16 %v172
    %v199 = vpack.c.b16 %v188, %v187
    %v200 = vpack.c.b16 %v190, %v189
    %v201 = vpack.c.b16 %v192, %v191
    %v202 = vpack.c.b16 %v194, %v193
    %v203 = vpack.c.b16 %v196, %v195
    %v204 = vpack.c.b16 %v198, %v197
    %v212 = vsel %vm143, %v160, 0
    %214 = vmatpush.bf16.msra.mxu0 0
    %215 = vmatpush.bf16.msra.mxu0 0
    %216 = vmatpush.bf16.msra.mxu0 %v204
    %217 = vmatpush.bf16.msra.mxu0 %v203
    %218 = vmatpush.bf16.msra.mxu0 %v202
    %219 = vmatpush.bf16.msra.mxu0 %v201
    %220 = vmatpush.bf16.msra.mxu0 %v200
    %221 = vmatpush.bf16.msra.mxu0 %v199
    %222 = vmatmul.bf16.gmra.mxu0 %v212
    %v223 = vpop.f32.mrf.mxu0
    %v224 = vadd.f32 %v174, %v223
    %v225 = vpop.f32.mrf.mxu0
    %226 = vdwg.mxu0
    %v227 = vmax.f32 %v224, 0.0
    %v228 = vpack.c.bf16 %v227, %v227
    %v229 = vld [vmem:[#allocation5] sm:$0xf]
    %v230 = vld [vmem:[#allocation5 + $0x4] sm:$0xf]
    %v231 = vld [vmem:[#allocation5 + $0x8] sm:$0xf]
    %v232 = vld [vmem:[#allocation5 + $0xc] sm:$0xf]
    %v233 = vld [vmem:[%s5 + $0x3] sm:$0x1]
    %v234 = vperm.slane %v233, 0
    %v239 = vunpack.c.l.b16 %v229
    %v240 = vunpack.c.l.b16 %v230
    %v241 = vunpack.c.l.b16 %v231
    %v242 = vunpack.c.l.b16 %v232
    %v243 = vpack.c.b16 %v240, %v239
    %v244 = vpack.c.b16 %v242, %v241
    %v248 = vsel %vm74, %v228, 0
    %250 = vmatpush.bf16.msra.mxu0 0
    %251 = vmatpush.bf16.msra.mxu0 0
    %252 = vmatpush.bf16.msra.mxu0 0
    %253 = vmatpush.bf16.msra.mxu0 0
    %254 = vmatpush.bf16.msra.mxu0 0
    %255 = vmatpush.bf16.msra.mxu0 0
    %256 = vmatpush.bf16.msra.mxu0 %v244
    %257 = vmatpush.bf16.msra.mxu0 %v243
    %258 = vmatmul.bf16.gmra.mxu0 %v248
    %v259 = vpop.f32.mrf.mxu0
    %v260 = vadd.f32 %v234, %v259
    %v261 = vpop.f32.mrf.mxu0
    %262 = vdwg.mxu0
    %264 = vrot.lane.b32.xlu0 %v157, 32
    %v265 = vpop.permute.xlu0 %264
    %v267 = vsel %vm74, %v260, %v265
    %v268 = vpack.c.bf16 %v267, %v267
    %269 = vst [vmem:[#allocation7] sm:$0xf] %v268
    // Predicated region
    $region34: #{tpu_custom_call.1} parent=1 // pred_check
      _
    $region35: #{tpu_custom_call.1} parent=1 // pred_check_branch
      %271 = sbr.rel (0) target = $region37
    $region36: #{tpu_custom_call.1} parent=1 // pred_region
      %273 = vsyncadd [#allocation4], 0
      %s275 = sshll.u32 [#allocation7], 4
      %s276 = int_to_ptr.vmem [resolvable:$true] %s275
      %s277 = sshll.u32 %s6, 4
      %s278 = int_to_ptr.hbm [resolvable:$true] %s277
      %280 = dma.vmem_to_hbm [thread:$0]  %s276, 64, %s278, [#allocation4]
    $region37: #{tpu_custom_call.1} parent=1 // pred_fallthru
      _
    // Predicated region
    $region38: #{tpu_custom_call.1} parent=1 // pred_check
      _
    $region39: #{tpu_custom_call.1} parent=1 // pred_check_branch
      %282 = sbr.rel (0) target = $region41
    $region40: #{tpu_custom_call.1} parent=1 // pred_region
      %284 = dma.done [#allocation4], 64
    $region41: #{tpu_custom_call.1} parent=1 // pred_fallthru
      _
    %285 = vsyncpa [#allocation3], 1
    %286 = vsyncpa [#allocation6], 1
    %287 = vsyncpa [#allocation4], 1

// kernel: tpu_custom_call.1
$region0: #{tpu_custom_call.1}
  #allocation0 [shape = 'u32[]', space=smem, size = 0x4, offset = 0x4, fixed_abs, tag = 'smem constant byte address 0x4 - core index']
  #allocation1 [shape = 'u32[72,128]{1,0:T(1,128)}', space=vmem, size = 0x9000, scoped, tag = 'internal scratch']
  %s0 = inlined_call_operand.hbm [shape: bf16[8,32], index: 0, kind: input, shape index: {}]
  %s1 = inlined_call_operand.vmem [shape: bf16[32,96], index: 1, kind: input, shape index: {}]
  %s2 = inlined_call_operand.vmem [shape: bf16[96,96], index: 2, kind: input, shape index: {}]
  %s3 = inlined_call_operand.vmem [shape: bf16[96,32], index: 3, kind: input, shape index: {}]
  %s4 = inlined_call_operand.hbm [shape: bf16[32,32], index: 4, kind: input, shape index: {}]
  %s5 = inlined_call_operand.vmem [shape: f32[4,96], index: 5, kind: input, shape index: {}]
  %s6 = inlined_call_operand.hbm [shape: bf16[8,128], index: 6, kind: output, shape index: {}]
  %s7 = sld [smem:[#allocation0]]
  $region42: #{tpu_custom_call.1} parent=0
    _
  %s9 = ssub.s32 1, %s7
  %s10 = scalar_select 0, %s9, %s7
  $region1: #{tpu_custom_call.1} parent=0
    #allocation2 [shape = 'u8[2048]{0}', space=vmem, size = 0x800, scoped, tag = 'input window, operand 0, single buffered']
    #allocation3 [shape = 's32[1]{0}', space=sflag, size = 0x4, scoped, tag = 'scoped memory for tpu_custom_call.1']
    #allocation4 [shape = 's32[1]{0}', space=sflag, size = 0x4, scoped, tag = 'scoped memory for tpu_custom_call.1']
    #allocation5 [shape = 'u8[8192]{0}', space=vmem, size = 0x2000, scoped, tag = 'input window, operand 4, single buffered']
    #allocation6 [shape = 's32[1]{0}', space=sflag, size = 0x4, scoped, tag = 'scoped memory for tpu_custom_call.1']
    #allocation7 [shape = 'u8[2048]{0}', space=vmem, size = 0x800, scoped, tag = 'output window, operand 0, single buffered']
    %11 = vsyncpa [#allocation3], 0
    %12 = vsyncpa [#allocation6], 0
    %13 = vsyncpa [#allocation4], 0
    // Predicated region
    $region2: #{tpu_custom_call.1} parent=1 // pred_check
      _
    $region3: #{tpu_custom_call.1} parent=1 // pred_check_branch
      %15 = sbr.rel (0) target = $region5
    $region4: #{tpu_custom_call.1} parent=1 // pred_region
      %17 = vsyncadd [#allocation3], 0
      %s19 = sshll.u32 %s0, 4
      %s20 = int_to_ptr.hbm [resolvable:$true] %s19
      %s21 = sshll.u32 [#allocation2], 4
      %s22 = int_to_ptr.vmem [resolvable:$true] %s21
      %24 = dma.hbm_to_vmem [thread:$0]  %s20, 64, %s22, [#allocation3]
    $region5: #{tpu_custom_call.1} parent=1 // pred_fallthru
      _
    // Predicated region
    $region6: #{tpu_custom_call.1} parent=1 // pred_check
      _
    $region7: #{tpu_custom_call.1} parent=1 // pred_check_branch
      %26 = sbr.rel (0) target = $region9
    $region8: #{tpu_custom_call.1} parent=1 // pred_region
      _
    $region9: #{tpu_custom_call.1} parent=1 // pred_fallthru
      _
    // Predicated region
    $region10: #{tpu_custom_call.1} parent=1 // pred_check
      _
    $region11: #{tpu_custom_call.1} parent=1 // pred_check_branch
      %28 = sbr.rel (0) target = $region13
    $region12: #{tpu_custom_call.1} parent=1 // pred_region
      _
    $region13: #{tpu_custom_call.1} parent=1 // pred_fallthru
      _
    // Predicated region
    $region14: #{tpu_custom_call.1} parent=1 // pred_check
      _
    $region15: #{tpu_custom_call.1} parent=1 // pred_check_branch
      %30 = sbr.rel (0) target = $region17
    $region16: #{tpu_custom_call.1} parent=1 // pred_region
      _
    $region17: #{tpu_custom_call.1} parent=1 // pred_fallthru
      _
    // Predicated region
    $region18: #{tpu_custom_call.1} parent=1 // pred_check
      _
    $region19: #{tpu_custom_call.1} parent=1 // pred_check_branch
      %32 = sbr.rel (0) target = $region21
    $region20: #{tpu_custom_call.1} parent=1 // pred_region
      %34 = vsyncadd [#allocation6], 0
      %s35 = sshll.u32 %s4, 4
      %s36 = int_to_ptr.hbm [resolvable:$true] %s35
      %s37 = sshll.u32 [#allocation5], 4
      %s38 = int_to_ptr.vmem [resolvable:$true] %s37
      %43 = dma.hbm_to_vmem [thread:$0]  %s36, 256, %s38, [#allocation6], 64, 64, 4
    $region21: #{tpu_custom_call.1} parent=1 // pred_fallthru
      _
    // Predicated region
    $region22: #{tpu_custom_call.1} parent=1 // pred_check
      _
    $region23: #{tpu_custom_call.1} parent=1 // pred_check_branch
      %45 = sbr.rel (0) target = $region25
    $region24: #{tpu_custom_call.1} parent=1 // pred_region
      _
    $region25: #{tpu_custom_call.1} parent=1 // pred_fallthru
      _
    // Predicated region
    $region26: #{tpu_custom_call.1} parent=1 // pred_check
      _
    $region27: #{tpu_custom_call.1} parent=1 // pred_check_branch
      %47 = sbr.rel (0) target = $region29
    $region28: #{tpu_custom_call.1} parent=1 // pred_region
      %49 = dma.done [#allocation3], 64
    $region29: #{tpu_custom_call.1} parent=1 // pred_fallthru
      _
    // Predicated region
    $region30: #{tpu_custom_call.1} parent=1 // pred_check
      _
    $region31: #{tpu_custom_call.1} parent=1 // pred_check_branch
      %51 = sbr.rel (0) target = $region33
    $region32: #{tpu_custom_call.1} parent=1 // pred_region
      %53 = dma.done [#allocation6], 256
    $region33: #{tpu_custom_call.1} parent=1 // pred_fallthru
      _
    %v55 = vld [vmem:[#allocation2] sm:$0xf]
    %v56 = vld [vmem:[%s1] sm:$0xf]
    %v57 = vld [vmem:[%s1 + $0x4] sm:$0xf]
    %v58 = vld [vmem:[%s1 + $0x8] sm:$0xf]
    %v59 = vld [vmem:[%s1 + $0xc] sm:$0xf]
    %v60 = vld [vmem:[%s5] sm:$0x1]
    %v61 = vperm.slane %v60, 0
    %v66 = vunpack.c.l.b16 %v56
    %v67 = vunpack.c.l.b16 %v57
    %v68 = vunpack.c.l.b16 %v58
    %v69 = vunpack.c.l.b16 %v59
    %v70 = vpack.c.b16 %v67, %v66
    %v71 = vpack.c.b16 %v69, %v68
    %vm74 = vcmask 261120
    %v76 = vsel %vm74, %v55, 0
    %78 = vmatpush.bf16.msra.mxu0 0
    %79 = vmatpush.bf16.msra.mxu0 0
    %80 = vmatpush.bf16.msra.mxu0 0
    %81 = vmatpush.bf16.msra.mxu0 0
    %82 = vmatpush.bf16.msra.mxu0 0
    %83 = vmatpush.bf16.msra.mxu0 0
    %84 = vmatpush.bf16.msra.mxu0 %v71
    %85 = vmatpush.bf16.msra.mxu0 %v70
    %86 = vmatmul.bf16.gmra.mxu0 %v76
    %v87 = vpop.f32.mrf.mxu0
    %v88 = vadd.f32 %v61, %v87
    %v89 = vpop.f32.mrf.mxu0
    %90 = vdwg.mxu0
    %v91 = vmax.f32 %v88, 0.0
    %v92 = vpack.c.bf16 %v91, %v91
    %v93 = vld [vmem:[%s2] sm:$0xf]
    %v94 = vld [vmem:[%s2 + $0x4] sm:$0xf]
    %v95 = vld [vmem:[%s2 + $0x8] sm:$0xf]
    %v96 = vld [vmem:[%s2 + $0xc] sm:$0xf]
    %v97 = vld [vmem:[%s2 + $0x10] sm:$0xf]
    %v98 = vld [vmem:[%s2 + $0x14] sm:$0xf]
    %v99 = vld [vmem:[%s2 + $0x18] sm:$0xf]
    %v100 = vld [vmem:[%s2 + $0x1c] sm:$0xf]
    %v101 = vld [vmem:[%s2 + $0x20] sm:$0xf]
    %v102 = vld [vmem:[%s2 + $0x24] sm:$0xf]
    %v103 = vld [vmem:[%s2 + $0x28] sm:$0xf]
    %v104 = vld [vmem:[%s2 + $0x2c] sm:$0xf]
    %v105 = vld [vmem:[%s5 + $0x1] sm:$0x1]
    %v106 = vperm.slane %v105, 0
    %v119 = vunpack.c.l.b16 %v93
    %v120 = vunpack.c.l.b16 %v94
    %v121 = vunpack.c.l.b16 %v95
    %v122 = vunpack.c.l.b16 %v96
    %v123 = vunpack.c.l.b16 %v97
    %v124 = vunpack.c.l.b16 %v98
    %v125 = vunpack.c.l.b16 %v99
    %v126 = vunpack.c.l.b16 %v100
    %v127 = vunpack.c.l.b16 %v101
    %v128 = vunpack.c.l.b16 %v102
    %v129 = vunpack.c.l.b16 %v103
    %v130 = vunpack.c.l.b16 %v104
    %v131 = vpack.c.b16 %v120, %v119
    %v132 = vpack.c.b16 %v122, %v121
    %v133 = vpack.c.b16 %v124, %v123
    %v134 = vpack.c.b16 %v126, %v125
    %v135 = vpack.c.b16 %v128, %v127
    %v136 = vpack.c.b16 %v130, %v129
    %vm143 = vcmask 785408
    %v145 = vsel %vm143, %v92, 0
    %147 = vmatpush.bf16.msra.mxu0 0
    %148 = vmatpush.bf16.msra.mxu0 0
    %149 = vmatpush.bf16.msra.mxu0 %v136
    %150 = vmatpush.bf16.msra.mxu0 %v135
    %151 = vmatpush.bf16.msra.mxu0 %v134
    %152 = vmatpush.bf16.msra.mxu0 %v133
    %153 = vmatpush.bf16.msra.mxu0 %v132
    %154 = vmatpush.bf16.msra.mxu0 %v131
    %155 = vmatmul.bf16.gmra.mxu0 %v145
    %v156 = vpop.f32.mrf.mxu0
    %v157 = vadd.f32 %v106, %v156
    %v158 = vpop.f32.mrf.mxu0
    %159 = vdwg.mxu0
    %v160 = vpack.c.bf16 %v157, %v157
    %v161 = vld [vmem:[%s3] sm:$0xf]
    %v162 = vld [vmem:[%s3 + $0x4] sm:$0xf]
    %v163 = vld [vmem:[%s3 + $0x8] sm:$0xf]
    %v164 = vld [vmem:[%s3 + $0xc] sm:$0xf]
    %v165 = vld [vmem:[%s3 + $0x10] sm:$0xf]
    %v166 = vld [vmem:[%s3 + $0x14] sm:$0xf]
    %v167 = vld [vmem:[%s3 + $0x18] sm:$0xf]
    %v168 = vld [vmem:[%s3 + $0x1c] sm:$0xf]
    %v169 = vld [vmem:[%s3 + $0x20] sm:$0xf]
    %v170 = vld [vmem:[%s3 + $0x24] sm:$0xf]
    %v171 = vld [vmem:[%s3 + $0x28] sm:$0xf]
    %v172 = vld [vmem:[%s3 + $0x2c] sm:$0xf]
    %v173 = vld [vmem:[%s5 + $0x2] sm:$0x1]
    %v174 = vperm.slane %v173, 0
    %v187 = vunpack.c.l.b16 %v161
    %v188 = vunpack.c.l.b16 %v162
    %v189 = vunpack.c.l.b16 %v163
    %v190 = vunpack.c.l.b16 %v164
    %v191 = vunpack.c.l.b16 %v165
    %v192 = vunpack.c.l.b16 %v166
    %v193 = vunpack.c.l.b16 %v167
    %v194 = vunpack.c.l.b16 %v168
    %v195 = vunpack.c.l.b16 %v169
    %v196 = vunpack.c.l.b16 %v170
    %v197 = vunpack.c.l.b16 %v171
    %v198 = vunpack.c.l.b16 %v172
    %v199 = vpack.c.b16 %v188, %v187
    %v200 = vpack.c.b16 %v190, %v189
    %v201 = vpack.c.b16 %v192, %v191
    %v202 = vpack.c.b16 %v194, %v193
    %v203 = vpack.c.b16 %v196, %v195
    %v204 = vpack.c.b16 %v198, %v197
    %v212 = vsel %vm143, %v160, 0
    %214 = vmatpush.bf16.msra.mxu0 0
    %215 = vmatpush.bf16.msra.mxu0 0
    %216 = vmatpush.bf16.msra.mxu0 %v204
    %217 = vmatpush.bf16.msra.mxu0 %v203
    %218 = vmatpush.bf16.msra.mxu0 %v202
    %219 = vmatpush.bf16.msra.mxu0 %v201
    %220 = vmatpush.bf16.msra.mxu0 %v200
    %221 = vmatpush.bf16.msra.mxu0 %v199
    %222 = vmatmul.bf16.gmra.mxu0 %v212
    %v223 = vpop.f32.mrf.mxu0
    %v224 = vadd.f32 %v174, %v223
    %v225 = vpop.f32.mrf.mxu0
    %226 = vdwg.mxu0
    %v227 = vmax.f32 %v224, 0.0
    %v228 = vpack.c.bf16 %v227, %v227
    %v229 = vld [vmem:[#allocation5] sm:$0xf]
    %v230 = vld [vmem:[#allocation5 + $0x4] sm:$0xf]
    %v231 = vld [vmem:[#allocation5 + $0x8] sm:$0xf]
    %v232 = vld [vmem:[#allocation5 + $0xc] sm:$0xf]
    %v233 = vld [vmem:[%s5 + $0x3] sm:$0x1]
    %v234 = vperm.slane %v233, 0
    %v239 = vunpack.c.l.b16 %v229
    %v240 = vunpack.c.l.b16 %v230
    %v241 = vunpack.c.l.b16 %v231
    %v242 = vunpack.c.l.b16 %v232
    %v243 = vpack.c.b16 %v240, %v239
    %v244 = vpack.c.b16 %v242, %v241
    %v248 = vsel %vm74, %v228, 0
    %250 = vmatpush.bf16.msra.mxu0 0
    %251 = vmatpush.bf16.msra.mxu0 0
    %252 = vmatpush.bf16.msra.mxu0 0
    %253 = vmatpush.bf16.msra.mxu0 0
    %254 = vmatpush.bf16.msra.mxu0 0
    %255 = vmatpush.bf16.msra.mxu0 0
    %256 = vmatpush.bf16.msra.mxu0 %v244
    %257 = vmatpush.bf16.msra.mxu0 %v243
    %258 = vmatmul.bf16.gmra.mxu0 %v248
    %v259 = vpop.f32.mrf.mxu0
    %v260 = vadd.f32 %v234, %v259
    %v261 = vpop.f32.mrf.mxu0
    %262 = vdwg.mxu0
    %264 = vrot.lane.b32.xlu0 %v157, 32
    %v265 = vpop.permute.xlu0 %264
    %v267 = vsel %vm74, %v260, %v265
    %v268 = vpack.c.bf16 %v267, %v267
    %269 = vst [vmem:[#allocation7] sm:$0xf] %v268
    // Predicated region
    $region34: #{tpu_custom_call.1} parent=1 // pred_check
      _
    $region35: #{tpu_custom_call.1} parent=1 // pred_check_branch
      %271 = sbr.rel (0) target = $region37
    $region36: #{tpu_custom_call.1} parent=1 // pred_region
      %273 = vsyncadd [#allocation4], 0
      %s275 = sshll.u32 [#allocation7], 4
      %s276 = int_to_ptr.vmem [resolvable:$true] %s275
      %s277 = sshll.u32 %s6, 4
      %s278 = int_to_ptr.hbm [resolvable:$true] %s277
      %280 = dma.vmem_to_hbm [thread:$0]  %s276, 64, %s278, [#allocation4]
    $region37: #{tpu_custom_call.1} parent=1 // pred_fallthru
      _
    // Predicated region
    $region38: #{tpu_custom_call.1} parent=1 // pred_check
      _
    $region39: #{tpu_custom_call.1} parent=1 // pred_check_branch
      %282 = sbr.rel (0) target = $region41
    $region40: #{tpu_custom_call.1} parent=1 // pred_region
      %284 = dma.done [#allocation4], 64
    $region41: #{tpu_custom_call.1} parent=1 // pred_fallthru
      _
    %285 = vsyncpa [#allocation3], 1
    %286 = vsyncpa [#allocation6], 1
    %287 = vsyncpa [#allocation4], 1

</llo_original>
